<compile_context>
chip_gen: v7x
topology: tpu7x:2x2x1
jax: 0.10.0
libtpu: 0.0.40
codegen_flags: <defaults>
</compile_context>

<pallas_src>
import math

import jax
import jax.numpy as jnp
from jax import lax
from jax.experimental import pallas as pl
from jax.experimental.pallas import tpu as pltpu
from jax.scipy.special import erf as _erf_exact

DIM = 32       # `dim` in FRFN
HIDDEN = 64    # `hidden_dim` in FRFN

_TAPS = tuple((ky - 1, kx - 1) for ky in range(3) for kx in range(3))


def _erf_poly(v):
    # Abramowitz & Stegun 7.1.26, |err| < 1.5e-7: keeps nn.GELU()'s exact
    # (erf-based) semantics without relying on an erf lowering inside Pallas.
    a1, a2, a3, a4, a5 = (0.254829592, -0.284496736, 1.421413741,
                          -1.453152027, 1.061405429)
    p = 0.3275911
    a = jnp.abs(v)
    t = 1.0 / (1.0 + p * a)
    poly = ((((a5 * t + a4) * t + a3) * t + a2) * t + a1) * t
    e = 1.0 - poly * jnp.exp(-a * a)
    return jnp.where(v >= 0.0, e, -e)


def _gelu(v):
    return 0.5 * v * (1.0 + _erf_poly(v * (1.0 / math.sqrt(2.0))))


_ROLL_SIGN = None


def _roll_sign():
    """Pin down pltpu.roll's rotation direction once with a tiny probe kernel."""
    global _ROLL_SIGN
    if _ROLL_SIGN is None:
        def probe(x_ref, o_ref):
            o_ref[...] = pltpu.roll(x_ref[...], 1, 1)

        x = lax.broadcasted_iota(jnp.float32, (8, 128), 1)
        r = jax.device_get(pl.pallas_call(
            probe, out_shape=jax.ShapeDtypeStruct((8, 128), jnp.float32))(x))
        if float(r[0, 0]) == 127.0:      # out[i] = x[i-1]  (jnp.roll convention)
            _ROLL_SIGN = -1
        elif float(r[0, 0]) == 1.0:      # out[i] = x[i+1]
            _ROLL_SIGN = 1
        else:
            raise RuntimeError("unexpected pltpu.roll semantics")
    return _ROLL_SIGN


def _make_kernel(B, HH, C, DC, HID, roll_sign):
    """Build the fused FRFN kernel for fixed static shapes (channel-major)."""
    HW = HH * HH
    NTOK = B * HW

    def shift_tok(v, off):
        # s[:, t] = v[:, t + off]; wrapped values only land at masked positions.
        if off == 0:
            return v
        return pltpu.roll(v, (roll_sign * off) % NTOK, 1)

    def kernel(x_ref, w1_ref, b1_ref, wdw_ref, bdw_ref, w2_ref, b2_ref, o_ref):
        x = x_ref[...]                       # (C, NTOK), tokens on lanes
        x1 = x[:DC, :]                       # channels through the partial conv
        x2 = x[DC:, :]                       # untouched channels

        # per-tap validity masks (zero padding of both 3x3 convs + no
        # cross-row / cross-image leakage of the flat token rolls)
        tok = lax.broadcasted_iota(jnp.int32, (1, NTOK), 1)
        yy = (tok % HW) // HH
        xx = tok % HH
        masks = []
        for dy, dx in _TAPS:
            ok = jnp.logical_and(
                jnp.logical_and(yy >= -dy, yy < HH - dy),
                jnp.logical_and(xx >= -dx, xx < HH - dx))
            masks.append(ok)

        # ---- partial conv folded into linear1: 9-tap im2col stacked on the
        #      sublane axis -> ONE (2*HID, 9*DC + C-DC) x (96, NTOK) matmul ----
        pieces = []
        for m, (dy, dx) in zip(masks, _TAPS):
            tap = shift_tok(x1, dy * HH + dx)
            pieces.append(jnp.where(m, tap, 0.0))
        pieces.append(x2)
        xim = jnp.concatenate(pieces, axis=0)             # (9*DC + C-DC, NTOK)

        h = jnp.dot(w1_ref[...], xim,
                    preferred_element_type=jnp.float32) + b1_ref[...]
        h = _gelu(h)                                      # (2*HID, NTOK)
        h1 = h[:HID, :]                                   # chunk() = sublane split
        h2 = h[HID:, :]

        # ---- depthwise 3x3 conv on h1 (roll + mask + per-channel weight) ----
        acc = jnp.zeros((HID, NTOK), jnp.float32)
        for m, (dy, dx), k in zip(masks, _TAPS, range(9)):
            tap = shift_tok(h1, dy * HH + dx)
            acc = acc + jnp.where(m, tap, 0.0) * wdw_ref[k]   # (HID,1) lane-bcast
        h1c = _gelu(acc + bdw_ref[...])

        # ---- gate, linear2, residual; lane-dense (C, NTOK) output ----
        g = h1c * h2
        o_ref[...] = (jnp.dot(w2_ref[...], g,
                              preferred_element_type=jnp.float32)
                      + b2_ref[...] + x)

    return kernel


def frfn_pallas(x, kern_params):
    """x: (B, C, H, W) float32 -> (B, C, H, W) float32."""
    w1T, b1c, wdw9, bdwc, w2T, b2c = kern_params
    B, C, H, W = x.shape
    HW = H * W
    HH = int(math.sqrt(HW))
    assert HH * HH == HW and C % 4 == 0
    DC = C // 4
    HID = bdwc.shape[0]
    NTOK = B * HW

    # PyTorch: x.reshape(B,-1,C).transpose(1,2).contiguous().view(B,HW,C)
    xs = jnp.transpose(x.reshape(B, HW, C), (0, 2, 1)).reshape(B, HW, C)
    # channel-major (C, B*HW): tokens on the 128-wide lane axis
    xcm = jnp.transpose(xs.reshape(NTOK, C), (1, 0))

    kernel = _make_kernel(B, HH, C, DC, HID, _roll_sign())

    y_cm = pl.pallas_call(
        kernel,
        out_shape=jax.ShapeDtypeStruct((C, NTOK), jnp.float32),
    )(xcm, w1T, b1c, wdw9, bdwc, w2T, b2c)

    # rearrange 'b (h w) c -> b c h w'
    return jnp.transpose(y_cm.reshape(C, B, HH, HH), (1, 0, 2, 3))


def init_params(key, dim, hidden):
    """Deterministic synthetic parameters in the PyTorch layouts."""
    dc = dim // 4
    k = jax.random.split(key, 7)
    s = 0.1
    wpc_oihw = s * jax.random.normal(k[0], (dc, dc, 3, 3), jnp.float32)   # partial_conv3 (no bias)
    w1_pt = s * jax.random.normal(k[1], (2 * hidden, dim), jnp.float32)   # Linear(dim, 2*hidden)
    b1 = s * jax.random.normal(k[2], (2 * hidden,), jnp.float32)
    wdw_pt = s * jax.random.normal(k[3], (hidden, 1, 3, 3), jnp.float32)  # depthwise Conv2d
    bdw = s * jax.random.normal(k[4], (hidden,), jnp.float32)
    w2_pt = s * jax.random.normal(k[5], (dim, hidden), jnp.float32)       # Linear(hidden, dim)
    b2 = s * jax.random.normal(k[6], (dim,), jnp.float32)
    return (wpc_oihw, w1_pt, b1, wdw_pt, bdw, w2_pt, b2)


def prepare_kernel_params(pt_params, dim, hidden):
    """Fold the partial conv into linear1 and lay weights out channel-major."""
    wpc_oihw, w1_pt, b1, wdw_pt, bdw, w2_pt, b2 = pt_params
    dc = dim // 4
    w1_math = w1_pt.T                              # (dim, 2*hidden) = [in, out]
    w1a, w1b = w1_math[:dc], w1_math[dc:]
    blocks = []
    for ky in range(3):
        for kx in range(3):
            wpc_k = wpc_oihw[:, :, ky, kx].T       # (in=dc, out=dc)
            blocks.append(wpc_k @ w1a)             # (dc, 2*hidden)
    blocks.append(w1b)
    w1T = jnp.concatenate(blocks, axis=0).T        # (2*hidden, 9*dc + dim-dc)
    # depthwise weights: wdw9[k, h, 0] = wdw_pt[h, 0, ky, kx], k = ky*3+kx
    wdw9 = jnp.transpose(wdw_pt.reshape(hidden, 9), (1, 0)).reshape(9, hidden, 1)
    return (w1T, b1.reshape(2 * hidden, 1), wdw9, bdw.reshape(hidden, 1),
            w2_pt, b2.reshape(dim, 1))


def frfn_ref(x, pt_params):
    """Pure-JAX mirror of the PyTorch forward (exact GELU), for verification."""
    wpc_oihw, w1_pt, b1, wdw_pt, bdw, w2_pt, b2 = pt_params
    B, C, H, W = x.shape
    HW = H * W
    hh = int(math.sqrt(HW))
    dc = C // 4
    hid = wdw_pt.shape[0]
    hp = lax.Precision.HIGHEST

    def gelu(v):
        return 0.5 * v * (1.0 + _erf_exact(v * (1.0 / math.sqrt(2.0))))

    xr = jnp.transpose(x.reshape(B, HW, C), (0, 2, 1)).reshape(B, HW, C)
    x_init = xr

    xc = jnp.transpose(xr.reshape(B, hh, hh, C), (0, 3, 1, 2))   # b c h w
    x1, x2 = xc[:, :dc], xc[:, dc:]
    x1 = lax.conv_general_dilated(x1, wpc_oihw, (1, 1), 'SAME',
                                  dimension_numbers=('NCHW', 'OIHW', 'NCHW'),
                                  precision=hp)
    xc = jnp.concatenate([x1, x2], axis=1)
    xf = jnp.transpose(xc, (0, 2, 3, 1)).reshape(B, HW, C)

    h = gelu(jnp.einsum('bnc,dc->bnd', xf, w1_pt, precision=hp) + b1)
    h1, h2 = h[..., :hid], h[..., hid:]
    h1c = jnp.transpose(h1.reshape(B, hh, hh, hid), (0, 3, 1, 2))
    h1c = lax.conv_general_dilated(h1c, wdw_pt, (1, 1), 'SAME',
                                   dimension_numbers=('NCHW', 'OIHW', 'NCHW'),
                                   feature_group_count=hid, precision=hp)
    h1c = gelu(h1c + bdw[None, :, None, None])
    h1 = jnp.transpose(h1c, (0, 2, 3, 1)).reshape(B, HW, hid)

    y = jnp.einsum('bnh,dh->bnd', h1 * h2, w2_pt, precision=hp) + b2 + x_init
    return jnp.transpose(y.reshape(B, hh, hh, C), (0, 3, 1, 2))


if __name__ == "__main__":
    B, H, W = 2, 8, 8
    key = jax.random.PRNGKey(0)
    kx_, kp = jax.random.split(key)
    x = jax.random.normal(kx_, (B, DIM, H, W), jnp.float32)

    pt_params = init_params(kp, DIM, HIDDEN)
    kern_params = prepare_kernel_params(pt_params, DIM, HIDDEN)

    y = frfn_pallas(x, kern_params)
    y = jax.block_until_ready(y)

    y_ref = frfn_ref(x, pt_params)
    err = float(jnp.max(jnp.abs(y - y_ref)))
    assert y.shape == (B, DIM, H, W), y.shape
    assert err < 2e-2, f"max abs diff too large: {err}"
    print("KERNEL_OK")
</pallas_src>

<mosaic_0001>
module attributes {stable_mosaic.version = 11 : i64} {
  func.func @probe(%arg0: memref<8x128xf32, #tpu.memory_space<vmem>>, %arg1: memref<8x128xf32, #tpu.memory_space<vmem>>) attributes {dimension_semantics = [], scalar_prefetch = 0 : i64, scratch_operands = 0 : i64, tpu.core_type = #tpu.core_type<tc>} {
    %c0 = arith.constant 0 : index
    %c0_0 = arith.constant 0 : index
    %0 = vector.load %arg0[%c0, %c0_0] : memref<8x128xf32, #tpu.memory_space<vmem>>, vector<8x128xf32>
    %c1_i32 = arith.constant 1 : i32
    %1 = tpu.dynamic_rotate %0 by %c1_i32 dim 1 : vector<8x128xf32>, i32 -> vector<8x128xf32>
    %c0_1 = arith.constant 0 : index
    %c0_2 = arith.constant 0 : index
    %2 = vector.load %arg1[%c0_1, %c0_2] : memref<8x128xf32, #tpu.memory_space<vmem>>, vector<8x128xf32>
    tpu.vector_store %arg1[%c0_1, %c0_2], %1 {strides = array<i32>} : memref<8x128xf32, #tpu.memory_space<vmem>>, vector<8x128xf32>,
    return
  }
}

</mosaic_0001>

<llo_original>
// kernel: tpu_custom_call.1
$region0: #{tpu_custom_call.1}
  #allocation0 [shape = 'u32[]', space=smem, size = 0x4, offset = 0x4, fixed_abs, tag = 'smem constant byte address 0x4 - core index']
  #allocation1 [shape = 'u32[144,128]{1,0:T(1,128)}', space=vmem, size = 0x12000, scoped, tag = 'internal scratch']
  %s0 = inlined_call_operand.hbm [shape: f32[8,128], index: 0, kind: input, shape index: {}]
  %s1 = inlined_call_operand.hbm [shape: f32[8,128], index: 1, kind: output, shape index: {}]
  %s2 = sld [smem:[#allocation0]]
  $region18: #{tpu_custom_call.1} parent=0
    _
  %s4 = ssub.s32 1, %s2
  %s5 = scalar_select 0, %s4, %s2
  $region1: #{tpu_custom_call.1} parent=0
    #allocation2 [shape = 'u8[4096]{0}', space=vmem, size = 0x1000, scoped, tag = 'input window, operand 0, single buffered']
    #allocation3 [shape = 's32[1]{0}', space=sflag, size = 0x4, scoped, tag = 'scoped memory for tpu_custom_call.1']
    #allocation4 [shape = 's32[1]{0}', space=sflag, size = 0x4, scoped, tag = 'scoped memory for tpu_custom_call.1']
    #allocation5 [shape = 'u8[4096]{0}', space=vmem, size = 0x1000, scoped, tag = 'output window, operand 0, single buffered']
    %6 = vsyncpa [#allocation3], 0
    %7 = vsyncpa [#allocation4], 0
    // Predicated region
    $region2: #{tpu_custom_call.1} parent=1 // pred_check
      _
    $region3: #{tpu_custom_call.1} parent=1 // pred_check_branch
      %9 = sbr.rel (0) target = $region5
    $region4: #{tpu_custom_call.1} parent=1 // pred_region
      %s11 = ssub.s32 128, 128
      %12 = vsyncadd [#allocation3], %s11
      %s14 = sshll.u32 [#allocation2], 4
      %s15 = int_to_ptr.vmem [resolvable:$true] %s14
      %17 = dma.hbm_to_vmem [thread:$0]  %s0, 128, %s15, [#allocation3]
    $region5: #{tpu_custom_call.1} parent=1 // pred_fallthru
      _
    // Predicated region
    $region6: #{tpu_custom_call.1} parent=1 // pred_check
      _
    $region7: #{tpu_custom_call.1} parent=1 // pred_check_branch
      %19 = sbr.rel (0) target = $region9
    $region8: #{tpu_custom_call.1} parent=1 // pred_region
      %20 = dma.done [#allocation3], 128
    $region9: #{tpu_custom_call.1} parent=1 // pred_fallthru
      _
    %v21 = vld [vmem:[#allocation2] sm:$0xff]
    %22 = vrot.lane.b32.xlu0 %v21, 1
    %v23 = vpop.permute.xlu0 %22
    %24 = vst [vmem:[#allocation5] sm:$0xff] %v23
    // Predicated region
    $region10: #{tpu_custom_call.1} parent=1 // pred_check
      _
    $region11: #{tpu_custom_call.1} parent=1 // pred_check_branch
      %26 = sbr.rel (0) target = $region13
    $region12: #{tpu_custom_call.1} parent=1 // pred_region
      %s28 = ssub.s32 128, 128
      %29 = vsyncadd [#allocation4], %s28
      %s31 = sshll.u32 [#allocation5], 4
      %s32 = int_to_ptr.vmem [resolvable:$true] %s31
      %34 = dma.vmem_to_hbm [thread:$0]  %s32, 128, %s1, [#allocation4]
    $region13: #{tpu_custom_call.1} parent=1 // pred_fallthru
      _
    // Predicated region
    $region14: #{tpu_custom_call.1} parent=1 // pred_check
      _
    $region15: #{tpu_custom_call.1} parent=1 // pred_check_branch
      %36 = sbr.rel (0) target = $region17
    $region16: #{tpu_custom_call.1} parent=1 // pred_region
      %37 = dma.done [#allocation4], 128
    $region17: #{tpu_custom_call.1} parent=1 // pred_fallthru
      _
    %38 = vsyncpa [#allocation3], 1
    %39 = vsyncpa [#allocation4], 1

</llo_original>
